<compile_context>
chip_gen: v7x
topology: tpu7x:2x2x1
jax: 0.10.0
libtpu: 0.0.40
codegen_flags: <defaults>
</compile_context>

<pallas_src>
import jax
import jax.numpy as jnp
from jax.experimental import pallas as pl
from jax.experimental.pallas import tpu as pltpu


def linear_kernel(x_ref, wt_ref, b_ref, o_ref):
    # x_ref: (B, IN), wt_ref: (IN, OUT) (pre-transposed weight),
    # b_ref: (1, OUT), o_ref: (B, OUT)
    x = x_ref[...].astype(jnp.float32)    # (B, IN)
    wt = wt_ref[...].astype(jnp.float32)  # (IN, OUT)
    b = b_ref[...].astype(jnp.float32)    # (1, OUT)

    in_f = x.shape[1]
    # VPU contraction: unroll K (=5) as acc += x[:, k] (col) * wt[k, :] (row).
    # Start the accumulator from the bias (broadcast (1,OUT) -> (B,OUT)).
    acc = x[:, 0:1] * wt[0:1, :] + b
    for k in range(1, in_f):              # static, fully unrolled at trace time
        acc = acc + x[:, k:k + 1] * wt[k:k + 1, :]

    o_ref[...] = acc.astype(o_ref.dtype)


def estimator_forward(x, weight, bias):
    """x: (B, 5) float32; weight: (5, 5) in PyTorch (out, in) layout; bias: (5,).

    Returns (B, 5) = x @ weight.T + bias.
    """
    B, in_f = x.shape
    out_f = weight.shape[0]

    # Hoist the transpose and bias reshape to trace time (outside the kernel).
    w_t = weight.T                 # (IN, OUT)
    bias2d = bias.reshape(1, out_f)

    vmem = pltpu.MemorySpace.VMEM
    return pl.pallas_call(
        linear_kernel,
        out_shape=jax.ShapeDtypeStruct((B, out_f), x.dtype),
        # Gridless: the kernel runs exactly once over the full (tiny) arrays.
        in_specs=[
            pl.BlockSpec(memory_space=vmem),  # x
            pl.BlockSpec(memory_space=vmem),  # W.T
            pl.BlockSpec(memory_space=vmem),  # bias
        ],
        out_specs=pl.BlockSpec(memory_space=vmem),
    )(x, w_t, bias2d)


if __name__ == "__main__":
    key = jax.random.PRNGKey(0)
    k_x, k_w, k_b = jax.random.split(key, 3)

    B, IN, OUT = 8, 5, 5

    # Deterministic parameter init mirroring torch.nn.Linear defaults:
    # uniform(-1/sqrt(in_features), 1/sqrt(in_features))
    bound = 1.0 / jnp.sqrt(jnp.float32(IN))
    weight = jax.random.uniform(k_w, (OUT, IN), jnp.float32, -bound, bound)
    bias = jax.random.uniform(k_b, (OUT,), jnp.float32, -bound, bound)

    x = jax.random.normal(k_x, (B, IN), jnp.float32)

    y = estimator_forward(x, weight, bias)
    y = jax.block_until_ready(y)

    # Reference check against plain JAX
    y_ref = x @ weight.T + bias
    assert jnp.allclose(y, y_ref, atol=1e-5, rtol=1e-5), "mismatch vs reference"

    print("KERNEL_OK")
</pallas_src>

<mosaic_0001>
module attributes {stable_mosaic.version = 11 : i64} {
  func.func @linear_kernel(%arg0: memref<8x5xf32, #tpu.memory_space<vmem>>, %arg1: memref<5x5xf32, #tpu.memory_space<vmem>>, %arg2: memref<1x5xf32, #tpu.memory_space<vmem>>, %arg3: memref<8x5xf32, #tpu.memory_space<vmem>>) attributes {dimension_semantics = [], scalar_prefetch = 0 : i64, scratch_operands = 0 : i64, tpu.core_type = #tpu.core_type<tc>} {
    %c0 = arith.constant 0 : index
    %c0_0 = arith.constant 0 : index
    %0 = vector.load %arg0[%c0, %c0_0] : memref<8x5xf32, #tpu.memory_space<vmem>>, vector<8x5xf32>
    %c0_1 = arith.constant 0 : index
    %c0_2 = arith.constant 0 : index
    %1 = vector.load %arg1[%c0_1, %c0_2] : memref<5x5xf32, #tpu.memory_space<vmem>>, vector<5x5xf32>
    %c0_3 = arith.constant 0 : index
    %c0_4 = arith.constant 0 : index
    %2 = vector.load %arg2[%c0_3, %c0_4] : memref<1x5xf32, #tpu.memory_space<vmem>>, vector<1x5xf32>
    %3 = vector.extract_strided_slice %0 {offsets = [0, 0], sizes = [8, 1], strides = [1, 1]} : vector<8x5xf32> to vector<8x1xf32>
    %4 = vector.extract_strided_slice %1 {offsets = [0, 0], sizes = [1, 5], strides = [1, 1]} : vector<5x5xf32> to vector<1x5xf32>
    %5 = vector.broadcast %3 : vector<8x1xf32> to vector<8x5xf32>
    %6 = vector.broadcast %4 : vector<1x5xf32> to vector<8x5xf32>
    %7 = arith.mulf %5, %6 : vector<8x5xf32>
    %8 = vector.broadcast %2 : vector<1x5xf32> to vector<8x5xf32>
    %9 = arith.addf %7, %8 : vector<8x5xf32>
    %10 = vector.extract_strided_slice %0 {offsets = [0, 1], sizes = [8, 1], strides = [1, 1]} : vector<8x5xf32> to vector<8x1xf32>
    %11 = vector.extract_strided_slice %1 {offsets = [1, 0], sizes = [1, 5], strides = [1, 1]} : vector<5x5xf32> to vector<1x5xf32>
    %12 = vector.broadcast %10 : vector<8x1xf32> to vector<8x5xf32>
    %13 = vector.broadcast %11 : vector<1x5xf32> to vector<8x5xf32>
    %14 = arith.mulf %12, %13 : vector<8x5xf32>
    %15 = arith.addf %9, %14 : vector<8x5xf32>
    %16 = vector.extract_strided_slice %0 {offsets = [0, 2], sizes = [8, 1], strides = [1, 1]} : vector<8x5xf32> to vector<8x1xf32>
    %17 = vector.extract_strided_slice %1 {offsets = [2, 0], sizes = [1, 5], strides = [1, 1]} : vector<5x5xf32> to vector<1x5xf32>
    %18 = vector.broadcast %16 : vector<8x1xf32> to vector<8x5xf32>
    %19 = vector.broadcast %17 : vector<1x5xf32> to vector<8x5xf32>
    %20 = arith.mulf %18, %19 : vector<8x5xf32>
    %21 = arith.addf %15, %20 : vector<8x5xf32>
    %22 = vector.extract_strided_slice %0 {offsets = [0, 3], sizes = [8, 1], strides = [1, 1]} : vector<8x5xf32> to vector<8x1xf32>
    %23 = vector.extract_strided_slice %1 {offsets = [3, 0], sizes = [1, 5], strides = [1, 1]} : vector<5x5xf32> to vector<1x5xf32>
    %24 = vector.broadcast %22 : vector<8x1xf32> to vector<8x5xf32>
    %25 = vector.broadcast %23 : vector<1x5xf32> to vector<8x5xf32>
    %26 = arith.mulf %24, %25 : vector<8x5xf32>
    %27 = arith.addf %21, %26 : vector<8x5xf32>
    %28 = vector.extract_strided_slice %0 {offsets = [0, 4], sizes = [8, 1], strides = [1, 1]} : vector<8x5xf32> to vector<8x1xf32>
    %29 = vector.extract_strided_slice %1 {offsets = [4, 0], sizes = [1, 5], strides = [1, 1]} : vector<5x5xf32> to vector<1x5xf32>
    %30 = vector.broadcast %28 : vector<8x1xf32> to vector<8x5xf32>
    %31 = vector.broadcast %29 : vector<1x5xf32> to vector<8x5xf32>
    %32 = arith.mulf %30, %31 : vector<8x5xf32>
    %33 = arith.addf %27, %32 : vector<8x5xf32>
    %c0_5 = arith.constant 0 : index
    %c0_6 = arith.constant 0 : index
    %34 = vector.load %arg3[%c0_5, %c0_6] : memref<8x5xf32, #tpu.memory_space<vmem>>, vector<8x5xf32>
    tpu.vector_store %arg3[%c0_5, %c0_6], %33 {strides = array<i32>} : memref<8x5xf32, #tpu.memory_space<vmem>>, vector<8x5xf32>,
    return
  }
}

</mosaic_0001>

<llo_original>
// kernel: tpu_custom_call.1
$region0: #{tpu_custom_call.1}
  #allocation0 [shape = 'u32[]', space=smem, size = 0x4, offset = 0x4, fixed_abs, tag = 'smem constant byte address 0x4 - core index']
  #allocation1 [shape = 'u32[144,128]{1,0:T(1,128)}', space=vmem, size = 0x12000, scoped, tag = 'internal scratch']
  %s0 = inlined_call_operand.hbm [shape: f32[8,5], index: 0, kind: input, shape index: {}]
  %s1 = inlined_call_operand.hbm [shape: f32[5,5], index: 1, kind: input, shape index: {}]
  %s2 = inlined_call_operand.vmem [shape: f32[1,5], index: 2, kind: input, shape index: {}]
  %s3 = inlined_call_operand.hbm [shape: f32[8,5], index: 3, kind: output, shape index: {}]
  %s4 = sld [smem:[#allocation0]]
  $region30: #{tpu_custom_call.1} parent=0
    _
  %s6 = ssub.s32 1, %s4
  %s7 = scalar_select 0, %s6, %s4
  $region1: #{tpu_custom_call.1} parent=0
    #allocation2 [shape = 'u8[4096]{0}', space=vmem, size = 0x1000, scoped, tag = 'input window, operand 0, single buffered']
    #allocation3 [shape = 's32[1]{0}', space=sflag, size = 0x4, scoped, tag = 'scoped memory for tpu_custom_call.1']
    #allocation4 [shape = 's32[1]{0}', space=sflag, size = 0x4, scoped, tag = 'scoped memory for tpu_custom_call.1']
    #allocation5 [shape = 'u8[4096]{0}', space=vmem, size = 0x1000, scoped, tag = 'input window, operand 1, single buffered']
    #allocation6 [shape = 's32[1]{0}', space=sflag, size = 0x4, scoped, tag = 'scoped memory for tpu_custom_call.1']
    #allocation7 [shape = 'u8[4096]{0}', space=vmem, size = 0x1000, scoped, tag = 'output window, operand 0, single buffered']
    %8 = vsyncpa [#allocation3], 0
    %9 = vsyncpa [#allocation6], 0
    %10 = vsyncpa [#allocation4], 0
    // Predicated region
    $region2: #{tpu_custom_call.1} parent=1 // pred_check
      _
    $region3: #{tpu_custom_call.1} parent=1 // pred_check_branch
      %12 = sbr.rel (0) target = $region5
    $region4: #{tpu_custom_call.1} parent=1 // pred_region
      %s14 = ssub.s32 128, 128
      %15 = vsyncadd [#allocation3], %s14
      %s17 = sshll.u32 [#allocation2], 4
      %s18 = int_to_ptr.vmem [resolvable:$true] %s17
      %20 = dma.hbm_to_vmem [thread:$0]  %s0, 128, %s18, [#allocation3]
    $region5: #{tpu_custom_call.1} parent=1 // pred_fallthru
      _
    // Predicated region
    $region6: #{tpu_custom_call.1} parent=1 // pred_check
      _
    $region7: #{tpu_custom_call.1} parent=1 // pred_check_branch
      %22 = sbr.rel (0) target = $region9
    $region8: #{tpu_custom_call.1} parent=1 // pred_region
      %s24 = ssub.s32 128, 128
      %25 = vsyncadd [#allocation6], %s24
      %s27 = sshll.u32 [#allocation5], 4
      %s28 = int_to_ptr.vmem [resolvable:$true] %s27
      %30 = dma.hbm_to_vmem [thread:$0]  %s1, 128, %s28, [#allocation6]
    $region9: #{tpu_custom_call.1} parent=1 // pred_fallthru
      _
    // Predicated region
    $region10: #{tpu_custom_call.1} parent=1 // pred_check
      _
    $region11: #{tpu_custom_call.1} parent=1 // pred_check_branch
      %32 = sbr.rel (0) target = $region13
    $region12: #{tpu_custom_call.1} parent=1 // pred_region
      _
    $region13: #{tpu_custom_call.1} parent=1 // pred_fallthru
      _
    // Predicated region
    $region14: #{tpu_custom_call.1} parent=1 // pred_check
      _
    $region15: #{tpu_custom_call.1} parent=1 // pred_check_branch
      %34 = sbr.rel (0) target = $region17
    $region16: #{tpu_custom_call.1} parent=1 // pred_region
      %35 = dma.done [#allocation3], 128
    $region17: #{tpu_custom_call.1} parent=1 // pred_fallthru
      _
    // Predicated region
    $region18: #{tpu_custom_call.1} parent=1 // pred_check
      _
    $region19: #{tpu_custom_call.1} parent=1 // pred_check_branch
      %37 = sbr.rel (0) target = $region21
    $region20: #{tpu_custom_call.1} parent=1 // pred_region
      %38 = dma.done [#allocation6], 128
    $region21: #{tpu_custom_call.1} parent=1 // pred_fallthru
      _
    %v39 = vld [vmem:[#allocation2] sm:$0xff]
    %v40 = vld [vmem:[#allocation5] sm:$0x1f]
    %v41 = vld [vmem:[%s2] sm:$0x1]
    %43 = vset.pattern.permute.xlu0 0
    %44 = vperm.xlu0 %43, %v39
    %v45 = vpop.permute.xlu0 %44
    %v47 = vlaneseq
    %v48 = vshrl.u32 %v47, 7
    %v49 = vsub.s32 0, %v48
    %v50 = vrot.slane %v40, %v49
    %v51 = vmul.f32 %v45, %v50
    %v53 = vlaneseq
    %v54 = vshrl.u32 %v53, 7
    %v55 = vsub.s32 0, %v54
    %v56 = vrot.slane %v41, %v55
    %v58 = vadd.f32 %v51, %v56
    %59 = vset.pattern.permute.xlu0 1
    %60 = vperm.xlu0 %59, %v39
    %v61 = vpop.permute.xlu0 %60
    %v63 = vlaneseq
    %v64 = vshrl.u32 %v63, 7
    %v65 = vsub.s32 1, %v64
    %v66 = vrot.slane %v40, %v65
    %v67 = vmul.f32 %v61, %v66
    %v68 = vadd.f32 %v58, %v67
    %69 = vset.pattern.permute.xlu0 2
    %70 = vperm.xlu0 %69, %v39
    %v71 = vpop.permute.xlu0 %70
    %v73 = vlaneseq
    %v74 = vshrl.u32 %v73, 7
    %v75 = vsub.s32 2, %v74
    %v76 = vrot.slane %v40, %v75
    %v77 = vmul.f32 %v71, %v76
    %v78 = vadd.f32 %v68, %v77
    %79 = vset.pattern.permute.xlu0 3
    %80 = vperm.xlu0 %79, %v39
    %v81 = vpop.permute.xlu0 %80
    %v83 = vlaneseq
    %v84 = vshrl.u32 %v83, 7
    %v85 = vsub.s32 3, %v84
    %v86 = vrot.slane %v40, %v85
    %v87 = vmul.f32 %v81, %v86
    %v88 = vadd.f32 %v78, %v87
    %89 = vset.pattern.permute.xlu0 4
    %90 = vperm.xlu0 %89, %v39
    %v91 = vpop.permute.xlu0 %90
    %v93 = vlaneseq
    %v94 = vshrl.u32 %v93, 7
    %v95 = vsub.s32 4, %v94
    %v96 = vrot.slane %v40, %v95
    %v97 = vmul.f32 %v91, %v96
    %v98 = vadd.f32 %v88, %v97
    %vm99 = vcmask 39936
    %100 = vst.msk [vmem:[#allocation7] sm:$0xff] %vm99, %v98
    // Predicated region
    $region22: #{tpu_custom_call.1} parent=1 // pred_check
      _
    $region23: #{tpu_custom_call.1} parent=1 // pred_check_branch
      %102 = sbr.rel (0) target = $region25
    $region24: #{tpu_custom_call.1} parent=1 // pred_region
      %s104 = ssub.s32 128, 128
      %105 = vsyncadd [#allocation4], %s104
      %s107 = sshll.u32 [#allocation7], 4
      %s108 = int_to_ptr.vmem [resolvable:$true] %s107
      %110 = dma.vmem_to_hbm [thread:$0]  %s108, 128, %s3, [#allocation4]
    $region25: #{tpu_custom_call.1} parent=1 // pred_fallthru
      _
    // Predicated region
    $region26: #{tpu_custom_call.1} parent=1 // pred_check
      _
    $region27: #{tpu_custom_call.1} parent=1 // pred_check_branch
      %112 = sbr.rel (0) target = $region29
    $region28: #{tpu_custom_call.1} parent=1 // pred_region
      %113 = dma.done [#allocation4], 128
    $region29: #{tpu_custom_call.1} parent=1 // pred_fallthru
      _
    %114 = vsyncpa [#allocation3], 1
    %115 = vsyncpa [#allocation6], 1
    %116 = vsyncpa [#allocation4], 1

</llo_original>
